<compile_context>
chip_gen: v5e
topology: v5e:2x2
jax: 0.10.0
libtpu: 0.0.40
codegen_flags: <defaults>
</compile_context>

<pallas_src>
import functools

import jax
import jax.numpy as jnp
from jax.experimental import pallas as pl
from jax.experimental.pallas import tpu as pltpu


# ----------------------------- kernel body ---------------------------------


def angle_resnet_block_kernel(a_ref, w1_ref, b1_ref, w2_ref, b2_ref, o_ref):
    """One tile of (packed) tokens through the full residual block."""
    # relu -> bf16 MXU operand (no separate residual copy kept live here)
    x = jnp.maximum(a_ref[...], 0.0).astype(jnp.bfloat16)
    x = jnp.dot(x, w1_ref[...], preferred_element_type=jnp.float32) + b1_ref[...]
    x = jnp.maximum(x, 0.0).astype(jnp.bfloat16)
    x = jnp.dot(x, w2_ref[...], preferred_element_type=jnp.float32) + b2_ref[...]
    # Re-read the residual from VMEM at the end instead of holding a full f32
    # tile across both matmuls (cuts VMEM temporaries / vreg live ranges).
    o_ref[...] = (x + a_ref[...].astype(jnp.float32)).astype(o_ref.dtype)


# --------------------------- parameter packing ------------------------------


def pack_angle_resnet_params(w1, b1, w2, b2):
    """One-time packing of AngleResnetBlock parameters (hoist out of forward).

    w1, w2 : (C, C) PyTorch nn.Linear layout [out_features, in_features].
    b1, b2 : (C,) biases.

    Returns (w1p, b1p, w2p, b2p) with weights block-diagonally replicated to
    (C*P, C*P) bf16 ([in, out] layout) and biases tiled to (1, C*P) f32, where
    P = 128 // C is the lane-packing factor.
    """
    w1 = jnp.asarray(w1)
    w2 = jnp.asarray(w2)
    c = w1.shape[0]
    # [out, in] -> [in, out] so the kernel computes x @ W (== x @ W.T PyTorch)
    w1t = w1.T.astype(jnp.float32)
    w2t = w2.T.astype(jnp.float32)
    b1r = jnp.asarray(b1).reshape(1, c).astype(jnp.float32)
    b2r = jnp.asarray(b2).reshape(1, c).astype(jnp.float32)

    p = 128 // c if (c < 128 and 128 % c == 0) else 1
    # TODO(synk): c_hidden values that do not divide 128 fall back to a
    # lane-sparse (last dim < 128) path; correct but slow.
    if p > 1:
        eye = jnp.eye(p, dtype=jnp.float32)
        w1p = jnp.kron(eye, w1t)          # block-diagonal (C*P, C*P)
        w2p = jnp.kron(eye, w2t)
        b1p = jnp.tile(b1r, (1, p))
        b2p = jnp.tile(b2r, (1, p))
    else:
        w1p, w2p, b1p, b2p = w1t, w2t, b1r, b2r

    return (w1p.astype(jnp.bfloat16), b1p,
            w2p.astype(jnp.bfloat16), b2p)


# ------------------------------- wrapper ------------------------------------


def _round_up(x, m):
    return ((x + m - 1) // m) * m


def _tpu_hints():
    """Best-effort (num_tensorcores, per-core VMEM budget in bytes)."""
    try:
        kind = jax.devices()[0].device_kind.lower()
    except Exception:  # pragma: no cover - e.g. interpret mode
        kind = ""
    if "v7" in kind:
        return 2, 56 * 2**20      # 2 TCs/chip, 64 MiB VMEM/TC -> leave headroom
    return 1, 100 * 2**20         # v5e / v6e: 1 TC, 128 MiB VMEM


@functools.partial(jax.jit, static_argnames=("tokens_per_tile",))
def angle_resnet_block(a, params, *, tokens_per_tile=None):
    """AngleResnetBlock forward.

    a      : (..., C) activations (any leading dims, native dtype is streamed).
    params : output of pack_angle_resnet_params().
    tokens_per_tile : sweepable token-tile size (kernel is HBM-bound; bigger
                      tiles amortize the ~0.35us per-grid-step overhead).
    """
    w1p, b1p, w2p, b2p = params
    orig_shape = a.shape
    C = orig_shape[-1]
    CP = w1p.shape[0]
    P = CP // C

    a2 = a.reshape(-1, C)
    M = a2.shape[0]

    n_tc, vmem_budget = _tpu_hints()
    if tokens_per_tile is None:
        # v7x (3.2 TB/s HBM) needs larger tiles to stay >> step overhead.
        tokens_per_tile = 32768 if n_tc > 1 else 16384

    # Pad only to a multiple of 8*P (so the repack reshape is legal and packed
    # rows are sublane-aligned).  Ragged final *tiles* are handled by Pallas
    # edge-block padding; rows are independent, garbage tail rows are sliced.
    M_pad = _round_up(M, 8 * P)
    if M_pad != M:
        a2 = jnp.pad(a2, ((0, M_pad - M), (0, 0)))
    Mp = M_pad // P
    a_packed = a2.reshape(Mp, CP)          # free row-major repack

    # ---- tile selection: large tiles, capped by VMEM budget ----
    itemsize = a.dtype.itemsize

    def vmem_need(t):
        io = 2 * 2 * t * CP * itemsize     # in + out, double-buffered
        tmp = 6 * t * CP * 4               # f32 intermediates headroom
        w = 2 * CP * CP * 2 + 2 * CP * 4   # resident bf16 weights + f32 biases
        return io + tmp + w

    tm_p = max(_round_up(max(tokens_per_tile // P, 8), 8), 8)
    tm_p = min(tm_p, Mp)
    while tm_p > 8 and vmem_need(tm_p) > vmem_budget:
        tm_p = max(_round_up(tm_p // 2, 8), 8)
    grid_m = pl.cdiv(Mp, tm_p)

    # v7x only: keep the step count even so both TensorCores stay balanced.
    if n_tc > 1 and grid_m % 2 == 1 and Mp > 8:
        for target in (grid_m + 1, grid_m + 3):
            cand = max(_round_up(pl.cdiv(Mp, target), 8), 8)
            if pl.cdiv(Mp, cand) % 2 == 0 and vmem_need(cand) <= vmem_budget:
                tm_p = cand
                grid_m = pl.cdiv(Mp, cand)
                break

    vmem_limit = int(min(vmem_budget, max(32 * 2**20, vmem_need(tm_p))))

    out_packed = pl.pallas_call(
        angle_resnet_block_kernel,
        out_shape=jax.ShapeDtypeStruct((Mp, CP), a.dtype),
        grid_spec=pltpu.PrefetchScalarGridSpec(
            num_scalar_prefetch=0,
            grid=(grid_m,),
            in_specs=[
                pl.BlockSpec((tm_p, CP), lambda i: (i, 0)),   # activations stream
                pl.BlockSpec((CP, CP), lambda i: (0, 0)),     # W1 (resident, bf16)
                pl.BlockSpec((1, CP), lambda i: (0, 0)),      # b1 (resident, f32)
                pl.BlockSpec((CP, CP), lambda i: (0, 0)),     # W2 (resident, bf16)
                pl.BlockSpec((1, CP), lambda i: (0, 0)),      # b2 (resident, f32)
            ],
            out_specs=pl.BlockSpec((tm_p, CP), lambda i: (i, 0)),
        ),
        compiler_params=pltpu.CompilerParams(
            dimension_semantics=("parallel",),
            vmem_limit_bytes=vmem_limit,
        ),
    )(a_packed, w1p, b1p, w2p, b2p)

    out = out_packed.reshape(M_pad, C)
    if M_pad != M:
        out = out[:M]
    return out.reshape(orig_shape)


# ------------------------- references for checking -------------------------


def reference_f32(a, w1, b1, w2, b2):
    """Exact f32 module semantics (PyTorch layout weights [out, in])."""
    x = jnp.maximum(a, 0.0)
    x = x @ w1.T + b1
    x = jnp.maximum(x, 0.0)
    x = x @ w2.T + b2
    return x + a


def reference_bf16(a, w1, b1, w2, b2):
    """Same math with the kernel's bf16 matmul operands (f32 accumulation)."""
    x = jnp.maximum(a, 0.0).astype(jnp.bfloat16)
    x = jnp.dot(x, w1.T.astype(jnp.bfloat16),
                preferred_element_type=jnp.float32) + b1
    x = jnp.maximum(x, 0.0).astype(jnp.bfloat16)
    x = jnp.dot(x, w2.T.astype(jnp.bfloat16),
                preferred_element_type=jnp.float32) + b2
    return (x + a).astype(a.dtype)


if __name__ == "__main__":
    c_hidden = 32
    key = jax.random.PRNGKey(0)
    k_w1, k_b1, k_w2, k_b2, k_a1, k_a2 = jax.random.split(key, 6)

    # Random (non-zero) parameters so both matmuls are actually exercised.
    # (OpenComplex's linear_2 uses 'final' init (zeros); the kernel is
    #  init-agnostic, so random weights give a stronger correctness check.)
    scale = jnp.sqrt(2.0 / c_hidden)
    # PyTorch nn.Linear layout [out_features, in_features]
    w1 = jax.random.normal(k_w1, (c_hidden, c_hidden), jnp.float32) * scale
    b1 = jax.random.normal(k_b1, (c_hidden,), jnp.float32) * 0.1
    w2 = jax.random.normal(k_w2, (c_hidden, c_hidden), jnp.float32) * scale
    b2 = jax.random.normal(k_b2, (c_hidden,), jnp.float32) * 0.1

    # One-time parameter packing (hoisted out of the forward path).
    params = pack_angle_resnet_params(w1, b1, w2, b2)

    b1r = b1.reshape(1, c_hidden)
    b2r = b2.reshape(1, c_hidden)

    # Test 1: small, spec-consistent shape with leading dims (batch=2, seq=8).
    a_small = jax.random.normal(k_a1, (2, 8, c_hidden), jnp.float32)
    # Test 2: ragged token count (not a multiple of 8*P) -> exercises the
    # pad-to-8P path, the cdiv grid and Pallas edge-block handling.
    a_big = jax.random.normal(k_a2, (318, c_hidden), jnp.float32)

    for a in (a_small, a_big):
        out = jax.block_until_ready(angle_resnet_block(a, params))
        assert out.shape == a.shape and out.dtype == a.dtype

        ref_b = reference_bf16(a, w1, b1r, w2, b2r)
        ref_f = reference_f32(a, w1, b1r, w2, b2r)
        # Tight check against the bf16-operand reference (same quantization).
        assert jnp.allclose(out, ref_b, atol=1e-4, rtol=1e-4), \
            "mismatch vs bf16 reference"
        # Loose check against the pure-f32 module semantics.
        assert jnp.allclose(out, ref_f, atol=5e-2, rtol=5e-2), \
            "mismatch vs f32 reference"

    print("KERNEL_OK")
</pallas_src>

<mosaic_0001>
module attributes {stable_mosaic.version = 11 : i64} {
  func.func @angle_resnet_block_kernel(%arg0: i32, %arg1: memref<8x128xf32, #tpu.memory_space<vmem>>, %arg2: memref<128x128xbf16, #tpu.memory_space<vmem>>, %arg3: memref<1x128xf32, #tpu.memory_space<vmem>>, %arg4: memref<128x128xbf16, #tpu.memory_space<vmem>>, %arg5: memref<1x128xf32, #tpu.memory_space<vmem>>, %arg6: memref<8x128xf32, #tpu.memory_space<vmem>>) attributes {dimension_semantics = [#tpu.dimension_semantics<parallel>], iteration_bounds = array<i64: 1>, scalar_prefetch = 0 : i64, scratch_operands = 0 : i64, tpu.core_type = #tpu.core_type<tc>, window_params = [{transform_indices = @transform_0, window_bounds = array<i64: 8, 128>}, {pipeline_mode = #tpu.pipeline_mode<synchronous>, transform_indices = @transform_1, window_bounds = array<i64: 128, 128>}, {pipeline_mode = #tpu.pipeline_mode<synchronous>, transform_indices = @transform_2, window_bounds = array<i64: 1, 128>}, {pipeline_mode = #tpu.pipeline_mode<synchronous>, transform_indices = @transform_3, window_bounds = array<i64: 128, 128>}, {pipeline_mode = #tpu.pipeline_mode<synchronous>, transform_indices = @transform_4, window_bounds = array<i64: 1, 128>}, {transform_indices = @transform_5, window_bounds = array<i64: 8, 128>}]} {
    %c0 = arith.constant 0 : index
    %c0_0 = arith.constant 0 : index
    %0 = vector.load %arg1[%c0, %c0_0] : memref<8x128xf32, #tpu.memory_space<vmem>>, vector<8x128xf32>
    %cst = arith.constant 0.000000e+00 : f32
    %1 = vector.broadcast %cst : f32 to vector<8x128xf32>
    %2 = arith.maximumf %0, %1 : vector<8x128xf32>
    %3 = arith.truncf %2 : vector<8x128xf32> to vector<8x128xbf16>
    %c0_1 = arith.constant 0 : index
    %c0_2 = arith.constant 0 : index
    %4 = vector.load %arg2[%c0_1, %c0_2] : memref<128x128xbf16, #tpu.memory_space<vmem>>, vector<128x128xbf16>
    %cst_3 = arith.constant dense<0.000000e+00> : vector<8x128xf32>
    %5 = tpu.matmul %3, %4, %cst_3 {dimension_numbers = #tpu.dot_dimension_numbers<[1], [0], [0], [1], [0, 0, 1, 1], [], []>} : vector<8x128xbf16>, vector<128x128xbf16>, vector<8x128xf32> -> vector<8x128xf32>
    %c0_4 = arith.constant 0 : index
    %c0_5 = arith.constant 0 : index
    %6 = vector.load %arg3[%c0_4, %c0_5] : memref<1x128xf32, #tpu.memory_space<vmem>>, vector<1x128xf32>
    %7 = vector.broadcast %6 : vector<1x128xf32> to vector<8x128xf32>
    %8 = arith.addf %5, %7 : vector<8x128xf32>
    %cst_6 = arith.constant 0.000000e+00 : f32
    %9 = vector.broadcast %cst_6 : f32 to vector<8x128xf32>
    %10 = arith.maximumf %8, %9 : vector<8x128xf32>
    %11 = arith.truncf %10 : vector<8x128xf32> to vector<8x128xbf16>
    %c0_7 = arith.constant 0 : index
    %c0_8 = arith.constant 0 : index
    %12 = vector.load %arg4[%c0_7, %c0_8] : memref<128x128xbf16, #tpu.memory_space<vmem>>, vector<128x128xbf16>
    %cst_9 = arith.constant dense<0.000000e+00> : vector<8x128xf32>
    %13 = tpu.matmul %11, %12, %cst_9 {dimension_numbers = #tpu.dot_dimension_numbers<[1], [0], [0], [1], [0, 0, 1, 1], [], []>} : vector<8x128xbf16>, vector<128x128xbf16>, vector<8x128xf32> -> vector<8x128xf32>
    %c0_10 = arith.constant 0 : index
    %c0_11 = arith.constant 0 : index
    %14 = vector.load %arg5[%c0_10, %c0_11] : memref<1x128xf32, #tpu.memory_space<vmem>>, vector<1x128xf32>
    %15 = vector.broadcast %14 : vector<1x128xf32> to vector<8x128xf32>
    %16 = arith.addf %13, %15 : vector<8x128xf32>
    %c0_12 = arith.constant 0 : index
    %c0_13 = arith.constant 0 : index
    %17 = vector.load %arg1[%c0_12, %c0_13] : memref<8x128xf32, #tpu.memory_space<vmem>>, vector<8x128xf32>
    %18 = arith.addf %16, %17 : vector<8x128xf32>
    %c0_14 = arith.constant 0 : index
    %c0_15 = arith.constant 0 : index
    %19 = vector.load %arg6[%c0_14, %c0_15] : memref<8x128xf32, #tpu.memory_space<vmem>>, vector<8x128xf32>
    tpu.vector_store %arg6[%c0_14, %c0_15], %18 {strides = array<i32>} : memref<8x128xf32, #tpu.memory_space<vmem>>, vector<8x128xf32>,
    return
  }
  func.func @transform_0(%arg0: i32) -> (i32, i32) {
    %c0_i32 = arith.constant 0 : i32
    %c0_i32_0 = arith.constant 0 : i32
    return %arg0, %c0_i32 : i32, i32
  }
  func.func @transform_1(%arg0: i32) -> (i32, i32) {
    %c0_i32 = arith.constant 0 : i32
    %c0_i32_0 = arith.constant 0 : i32
    %c0_i32_1 = arith.constant 0 : i32
    return %c0_i32, %c0_i32_0 : i32, i32
  }
  func.func @transform_2(%arg0: i32) -> (i32, i32) {
    %c0_i32 = arith.constant 0 : i32
    %c0_i32_0 = arith.constant 0 : i32
    %c0_i32_1 = arith.constant 0 : i32
    return %c0_i32, %c0_i32_0 : i32, i32
  }
  func.func @transform_3(%arg0: i32) -> (i32, i32) {
    %c0_i32 = arith.constant 0 : i32
    %c0_i32_0 = arith.constant 0 : i32
    %c0_i32_1 = arith.constant 0 : i32
    return %c0_i32, %c0_i32_0 : i32, i32
  }
  func.func @transform_4(%arg0: i32) -> (i32, i32) {
    %c0_i32 = arith.constant 0 : i32
    %c0_i32_0 = arith.constant 0 : i32
    %c0_i32_1 = arith.constant 0 : i32
    return %c0_i32, %c0_i32_0 : i32, i32
  }
  func.func @transform_5(%arg0: i32) -> (i32, i32) {
    %c0_i32 = arith.constant 0 : i32
    %c0_i32_0 = arith.constant 0 : i32
    return %arg0, %c0_i32 : i32, i32
  }
}

</mosaic_0001>

<llo_original>
// kernel: angle_resnet_block.1
$region0: #{angle_resnet_block.1}
  #allocation0 [shape = 'u32[]', space=smem, size = 0x4, offset = 0x4, fixed_abs, tag = 'smem constant byte address 0x4 - core index']
  #allocation1 [shape = 'u32[72,128]{1,0:T(1,128)}', space=vmem, size = 0x9000, scoped, tag = 'internal scratch']
  %s0 = inlined_call_operand.vmem [shape: f32[8,128], index: 0, kind: input, shape index: {}]
  %s1 = inlined_call_operand.vmem [shape: bf16[128,128], index: 1, kind: input, shape index: {}]
  %s2 = inlined_call_operand.vmem [shape: f32[1,128], index: 2, kind: input, shape index: {}]
  %s3 = inlined_call_operand.hbm [shape: bf16[128,128], index: 3, kind: input, shape index: {}]
  %s4 = inlined_call_operand.vmem [shape: f32[1,128], index: 4, kind: input, shape index: {}]
  %s5 = inlined_call_operand.vmem [shape: f32[8,128], index: 5, kind: output, shape index: {}]
  %s6 = sld [smem:[#allocation0]]
  $region34: #{angle_resnet_block.1} parent=0
    _
  %s8 = ssub.s32 1, %s6
  %s9 = scalar_select 0, %s8, %s6
  $region1: #{angle_resnet_block.1} parent=0
    #allocation2 [shape = 'u8[32768]{0}', space=vmem, size = 0x8000, scoped, tag = 'input window, operand 3, single buffered']
    #allocation3 [shape = 's32[1]{0}', space=sflag, size = 0x4, scoped, tag = 'scoped memory for angle_resnet_block.1']
    %10 = vsyncpa [#allocation3], 0
    // Predicated region
    $region2: #{angle_resnet_block.1} parent=1 // pred_check
      _
    $region3: #{angle_resnet_block.1} parent=1 // pred_check_branch
      %12 = sbr.rel (0) target = $region5
    $region4: #{angle_resnet_block.1} parent=1 // pred_region
      _
    $region5: #{angle_resnet_block.1} parent=1 // pred_fallthru
      _
    // Predicated region
    $region6: #{angle_resnet_block.1} parent=1 // pred_check
      _
    $region7: #{angle_resnet_block.1} parent=1 // pred_check_branch
      %14 = sbr.rel (0) target = $region9
    $region8: #{angle_resnet_block.1} parent=1 // pred_region
      _
    $region9: #{angle_resnet_block.1} parent=1 // pred_fallthru
      _
    // Predicated region
    $region10: #{angle_resnet_block.1} parent=1 // pred_check
      _
    $region11: #{angle_resnet_block.1} parent=1 // pred_check_branch
      %16 = sbr.rel (0) target = $region13
    $region12: #{angle_resnet_block.1} parent=1 // pred_region
      _
    $region13: #{angle_resnet_block.1} parent=1 // pred_fallthru
      _
    // Predicated region
    $region14: #{angle_resnet_block.1} parent=1 // pred_check
      _
    $region15: #{angle_resnet_block.1} parent=1 // pred_check_branch
      %18 = sbr.rel (0) target = $region17
    $region16: #{angle_resnet_block.1} parent=1 // pred_region
      %20 = vsyncadd [#allocation3], 0
      %s21 = sshll.u32 %s3, 4
      %s22 = int_to_ptr.hbm [resolvable:$true] %s21
      %s23 = sshll.u32 [#allocation2], 4
      %s24 = int_to_ptr.vmem [resolvable:$true] %s23
      %29 = dma.hbm_to_vmem [thread:$0]  %s22, 1024, %s24, [#allocation3], 64, 64, 4
    $region17: #{angle_resnet_block.1} parent=1 // pred_fallthru
      _
    // Predicated region
    $region18: #{angle_resnet_block.1} parent=1 // pred_check
      _
    $region19: #{angle_resnet_block.1} parent=1 // pred_check_branch
      %31 = sbr.rel (0) target = $region21
    $region20: #{angle_resnet_block.1} parent=1 // pred_region
      _
    $region21: #{angle_resnet_block.1} parent=1 // pred_fallthru
      _
    // Predicated region
    $region22: #{angle_resnet_block.1} parent=1 // pred_check
      _
    $region23: #{angle_resnet_block.1} parent=1 // pred_check_branch
      %33 = sbr.rel (0) target = $region25
    $region24: #{angle_resnet_block.1} parent=1 // pred_region
      %35 = dma.done [#allocation3], 1024
    $region25: #{angle_resnet_block.1} parent=1 // pred_fallthru
      _
    %v36 = vld [vmem:[%s0] sm:$0xff]
    %v37 = vmax.f32 %v36, 0.0
    %v38 = vpack.c.bf16 %v37, %v37
    %v39 = vld [vmem:[%s1] sm:$0xf]
    %v40 = vld [vmem:[%s1 + $0x4] sm:$0xf]
    %v41 = vld [vmem:[%s1 + $0x8] sm:$0xf]
    %v42 = vld [vmem:[%s1 + $0xc] sm:$0xf]
    %v43 = vld [vmem:[%s1 + $0x10] sm:$0xf]
    %v44 = vld [vmem:[%s1 + $0x14] sm:$0xf]
    %v45 = vld [vmem:[%s1 + $0x18] sm:$0xf]
    %v46 = vld [vmem:[%s1 + $0x1c] sm:$0xf]
    %v47 = vld [vmem:[%s1 + $0x20] sm:$0xf]
    %v48 = vld [vmem:[%s1 + $0x24] sm:$0xf]
    %v49 = vld [vmem:[%s1 + $0x28] sm:$0xf]
    %v50 = vld [vmem:[%s1 + $0x2c] sm:$0xf]
    %v51 = vld [vmem:[%s1 + $0x30] sm:$0xf]
    %v52 = vld [vmem:[%s1 + $0x34] sm:$0xf]
    %v53 = vld [vmem:[%s1 + $0x38] sm:$0xf]
    %v54 = vld [vmem:[%s1 + $0x3c] sm:$0xf]
    %v55 = vld [vmem:[%s2] sm:$0x1]
    %v57 = vperm.slane %v55, 0
    %v75 = vunpack.c.l.b16 %v39
    %v76 = vunpack.c.l.b16 %v40
    %v77 = vunpack.c.l.b16 %v41
    %v78 = vunpack.c.l.b16 %v42
    %v79 = vunpack.c.l.b16 %v43
    %v80 = vunpack.c.l.b16 %v44
    %v81 = vunpack.c.l.b16 %v45
    %v82 = vunpack.c.l.b16 %v46
    %v83 = vunpack.c.l.b16 %v47
    %v84 = vunpack.c.l.b16 %v48
    %v85 = vunpack.c.l.b16 %v49
    %v86 = vunpack.c.l.b16 %v50
    %v87 = vunpack.c.l.b16 %v51
    %v88 = vunpack.c.l.b16 %v52
    %v89 = vunpack.c.l.b16 %v53
    %v90 = vunpack.c.l.b16 %v54
    %v91 = vpack.c.b16 %v76, %v75
    %v92 = vpack.c.b16 %v78, %v77
    %v93 = vpack.c.b16 %v80, %v79
    %v94 = vpack.c.b16 %v82, %v81
    %v95 = vpack.c.b16 %v84, %v83
    %v96 = vpack.c.b16 %v86, %v85
    %v97 = vpack.c.b16 %v88, %v87
    %v98 = vpack.c.b16 %v90, %v89
    %107 = vmatpush.bf16.msra.mxu0 %v98
    %108 = vmatpush.bf16.msra.mxu0 %v97
    %109 = vmatpush.bf16.msra.mxu0 %v96
    %110 = vmatpush.bf16.msra.mxu0 %v95
    %111 = vmatpush.bf16.msra.mxu0 %v94
    %112 = vmatpush.bf16.msra.mxu0 %v93
    %113 = vmatpush.bf16.msra.mxu0 %v92
    %114 = vmatpush.bf16.msra.mxu0 %v91
    %115 = vmatmul.bf16.gmra.mxu0 %v38
    %v116 = vpop.f32.mrf.mxu0
    %v117 = vadd.f32 %v57, %v116
    %v118 = vpop.f32.mrf.mxu0
    %119 = vdwg.mxu0
    %v120 = vmax.f32 %v117, 0.0
    %v121 = vpack.c.bf16 %v120, %v120
    %v122 = vld [vmem:[#allocation2] sm:$0xf]
    %v123 = vld [vmem:[#allocation2 + $0x4] sm:$0xf]
    %v124 = vld [vmem:[#allocation2 + $0x8] sm:$0xf]
    %v125 = vld [vmem:[#allocation2 + $0xc] sm:$0xf]
    %v126 = vld [vmem:[#allocation2 + $0x10] sm:$0xf]
    %v127 = vld [vmem:[#allocation2 + $0x14] sm:$0xf]
    %v128 = vld [vmem:[#allocation2 + $0x18] sm:$0xf]
    %v129 = vld [vmem:[#allocation2 + $0x1c] sm:$0xf]
    %v130 = vld [vmem:[#allocation2 + $0x20] sm:$0xf]
    %v131 = vld [vmem:[#allocation2 + $0x24] sm:$0xf]
    %v132 = vld [vmem:[#allocation2 + $0x28] sm:$0xf]
    %v133 = vld [vmem:[#allocation2 + $0x2c] sm:$0xf]
    %v134 = vld [vmem:[#allocation2 + $0x30] sm:$0xf]
    %v135 = vld [vmem:[#allocation2 + $0x34] sm:$0xf]
    %v136 = vld [vmem:[#allocation2 + $0x38] sm:$0xf]
    %v137 = vld [vmem:[#allocation2 + $0x3c] sm:$0xf]
    %v138 = vld [vmem:[%s4] sm:$0x1]
    %v140 = vperm.slane %v138, 0
    %v158 = vunpack.c.l.b16 %v122
    %v159 = vunpack.c.l.b16 %v123
    %v160 = vunpack.c.l.b16 %v124
    %v161 = vunpack.c.l.b16 %v125
    %v162 = vunpack.c.l.b16 %v126
    %v163 = vunpack.c.l.b16 %v127
    %v164 = vunpack.c.l.b16 %v128
    %v165 = vunpack.c.l.b16 %v129
    %v166 = vunpack.c.l.b16 %v130
    %v167 = vunpack.c.l.b16 %v131
    %v168 = vunpack.c.l.b16 %v132
    %v169 = vunpack.c.l.b16 %v133
    %v170 = vunpack.c.l.b16 %v134
    %v171 = vunpack.c.l.b16 %v135
    %v172 = vunpack.c.l.b16 %v136
    %v173 = vunpack.c.l.b16 %v137
    %v174 = vpack.c.b16 %v159, %v158
    %v175 = vpack.c.b16 %v161, %v160
    %v176 = vpack.c.b16 %v163, %v162
    %v177 = vpack.c.b16 %v165, %v164
    %v178 = vpack.c.b16 %v167, %v166
    %v179 = vpack.c.b16 %v169, %v168
    %v180 = vpack.c.b16 %v171, %v170
    %v181 = vpack.c.b16 %v173, %v172
    %190 = vmatpush.bf16.msra.mxu0 %v181
    %191 = vmatpush.bf16.msra.mxu0 %v180
    %192 = vmatpush.bf16.msra.mxu0 %v179
    %193 = vmatpush.bf16.msra.mxu0 %v178
    %194 = vmatpush.bf16.msra.mxu0 %v177
    %195 = vmatpush.bf16.msra.mxu0 %v176
    %196 = vmatpush.bf16.msra.mxu0 %v175
    %197 = vmatpush.bf16.msra.mxu0 %v174
    %198 = vmatmul.bf16.gmra.mxu0 %v121
    %v199 = vpop.f32.mrf.mxu0
    %v200 = vadd.f32 %v140, %v199
    %v201 = vpop.f32.mrf.mxu0
    %202 = vdwg.mxu0
    %v203 = vadd.f32 %v200, %v36
    %204 = vst [vmem:[%s5] sm:$0xff] %v203
    // Predicated region
    $region26: #{angle_resnet_block.1} parent=1 // pred_check
      _
    $region27: #{angle_resnet_block.1} parent=1 // pred_check_branch
      %206 = sbr.rel (0) target = $region29
    $region28: #{angle_resnet_block.1} parent=1 // pred_region
      _
    $region29: #{angle_resnet_block.1} parent=1 // pred_fallthru
      _
    // Predicated region
    $region30: #{angle_resnet_block.1} parent=1 // pred_check
      _
    $region31: #{angle_resnet_block.1} parent=1 // pred_check_branch
      %208 = sbr.rel (0) target = $region33
    $region32: #{angle_resnet_block.1} parent=1 // pred_region
      _
    $region33: #{angle_resnet_block.1} parent=1 // pred_fallthru
      _
    %209 = vsyncpa [#allocation3], 1

</llo_original>
